<compile_context>
chip_gen: v7x
topology: tpu7x:2x2x1
jax: 0.10.0
libtpu: 0.0.40
codegen_flags: <defaults>
</compile_context>

<pallas_src>
import functools

import jax
import jax.numpy as jnp
from jax.experimental import pallas as pl
from jax.experimental.pallas import tpu as pltpu


def _round_up(n, m):
    return ((n + m - 1) // m) * m


# ----------------------------------------------------------------------------
# Fused kernel: all LSTM layers for the single timestep, zero initial state.
#   x_ref : (B, Din)            float32  (cast to bf16 in-kernel for the MXU)
#   p_ref : (rows, 4H)          bfloat16 packed [W0^T | b0*8 | W1^T | b1*8 | ...]
#   y_ref : (B, H)              float32  (last layer hidden == squeezed output)
#   h_ref : (L, B, H)           float32
#   c_ref : (L, B, H)           float32
# `layout[l] = (w_start_row, d_in, bias_start_row)` — static Python metadata.
# W_hh is never loaded: with h_prev = 0 it contributes nothing; the f-gate term
# vanishes because c_prev = 0.
# ----------------------------------------------------------------------------
def _encoder_kernel(x_ref, p_ref, y_ref, h_ref, c_ref, *, hidden, layout):
    H = hidden
    inp = x_ref[...].astype(jnp.bfloat16)          # bf16 MXU operand, f32 accum
    h_new = None
    for layer, (w_start, d_in, b_start) in enumerate(layout):
        # (B, 4H) = inp @ W_ih^T  — single MXU push per layer (bf16 x bf16 -> f32).
        w = p_ref[w_start:w_start + d_in, :]                       # (d_in, 4H) bf16
        gates = jnp.dot(inp, w, preferred_element_type=jnp.float32)
        # Bias block is stored broadcast over 8 rows (sublane-aligned bf16 slice);
        # take one row and let the add broadcast over the batch sublanes.
        bias = p_ref[b_start:b_start + 8, :][0:1, :].astype(jnp.float32)  # (1, 4H)
        gates = gates + bias

        # Two full-width EUP activations (f-gate lanes are free filler).
        sg = jax.nn.sigmoid(gates)
        tg = jnp.tanh(gates)

        # PyTorch gate order: i | f | g | o.  c_prev == 0 => c_new = i * g.
        c_new = sg[:, 0 * H:1 * H] * tg[:, 2 * H:3 * H]
        h_new = sg[:, 3 * H:4 * H] * jnp.tanh(c_new)

        # Direct offset stores to the final outputs — no lane concatenate.
        h_ref[layer] = h_new
        c_ref[layer] = c_new

        inp = h_new.astype(jnp.bfloat16)           # feed next layer (stays in vregs)

    y_ref[...] = h_new                             # last layer's hidden


# ----------------------------------------------------------------------------
# One-time parameter preparation (hoisted out of the forward pass).
# Packs every layer's (W_ih^T, b_ih + b_hh) into ONE bf16 array:
#   rows [cur, cur+d_in)          : W_ih^T              (zero-padded to 8-row mult)
#   rows [cur+pad, cur+pad+8)     : (b_ih + b_hh) broadcast to 8 identical rows
# Returns (packed_params, layout) with layout a static tuple of
# (w_start_row, d_in, bias_start_row) per layer.  W_hh is dropped (zero h_0).
# ----------------------------------------------------------------------------
def prepare_params(params):
    blocks, layout = [], []
    cur = 0
    for (w_ih, _w_hh, b_ih, b_hh) in params:
        four_h, d_in = w_ih.shape
        w_t = jnp.transpose(w_ih).astype(jnp.float32)            # (d_in, 4H)
        w_rows = _round_up(d_in, 8)
        w_block = jnp.zeros((w_rows, four_h), jnp.float32).at[:d_in, :].set(w_t)
        bias = (b_ih + b_hh).astype(jnp.float32).reshape(1, four_h)
        b_block = jnp.broadcast_to(bias, (8, four_h))
        layout.append((cur, int(d_in), cur + w_rows))
        blocks.append(w_block)
        blocks.append(b_block)
        cur += w_rows + 8
    packed = jnp.concatenate(blocks, axis=0).astype(jnp.bfloat16)  # (rows, 4H)
    return packed, tuple(layout)


# ----------------------------------------------------------------------------
# Encoder forward: a single pallas_call, outputs used as-is (no post-processing).
# ----------------------------------------------------------------------------
@functools.partial(jax.jit, static_argnums=(2, 3, 4))
def encoder_forward(x, packed_params, layout, num_layers, hidden_channels):
    B = x.shape[0]
    H = hidden_channels

    kernel = functools.partial(_encoder_kernel, hidden=H, layout=layout)
    vmem = pl.BlockSpec(memory_space=pltpu.MemorySpace.VMEM)

    y, h_n, c_n = pl.pallas_call(
        kernel,
        out_shape=(
            jax.ShapeDtypeStruct((B, H), jnp.float32),
            jax.ShapeDtypeStruct((num_layers, B, H), jnp.float32),
            jax.ShapeDtypeStruct((num_layers, B, H), jnp.float32),
        ),
        in_specs=[vmem, vmem],
        out_specs=(vmem, vmem, vmem),
    )(x, packed_params)

    return y, (h_n, c_n)


# ----------------------------------------------------------------------------
# Pure-JAX reference with the FULL LSTM-cell math (includes h@W_hh and the
# f-gate) to independently validate the zero-initial-state simplification.
# ----------------------------------------------------------------------------
def encoder_reference(x, params, num_layers, hidden_channels):
    B = x.shape[0]
    H = hidden_channels
    h_n_list, c_n_list = [], []
    inp = x
    for layer in range(num_layers):
        w_ih, w_hh, b_ih, b_hh = params[layer]
        h_prev = jnp.zeros((B, H), jnp.float32)
        c_prev = jnp.zeros((B, H), jnp.float32)
        gates = inp @ w_ih.T + h_prev @ w_hh.T + b_ih + b_hh
        i_g = jax.nn.sigmoid(gates[:, 0 * H:1 * H])
        f_g = jax.nn.sigmoid(gates[:, 1 * H:2 * H])
        g_g = jnp.tanh(gates[:, 2 * H:3 * H])
        o_g = jax.nn.sigmoid(gates[:, 3 * H:4 * H])
        c_new = f_g * c_prev + i_g * g_g
        h_new = o_g * jnp.tanh(c_new)
        h_n_list.append(h_new)
        c_n_list.append(c_new)
        inp = h_new
    return inp, (jnp.stack(h_n_list, 0), jnp.stack(c_n_list, 0))


# ----------------------------------------------------------------------------
# Deterministic parameter init (PyTorch LSTM-style uniform(-1/sqrt(H), 1/sqrt(H))).
# ----------------------------------------------------------------------------
def init_params(key, in_channels, hidden_channels, num_layers):
    H = hidden_channels
    bound = 1.0 / jnp.sqrt(jnp.float32(H))
    params = []
    for layer in range(num_layers):
        d_in = in_channels if layer == 0 else H
        key, k1, k2, k3, k4 = jax.random.split(key, 5)
        w_ih = jax.random.uniform(k1, (4 * H, d_in), jnp.float32, -bound, bound)
        w_hh = jax.random.uniform(k2, (4 * H, H), jnp.float32, -bound, bound)
        b_ih = jax.random.uniform(k3, (4 * H,), jnp.float32, -bound, bound)
        b_hh = jax.random.uniform(k4, (4 * H,), jnp.float32, -bound, bound)
        params.append((w_ih, w_hh, b_ih, b_hh))
    return params


if __name__ == "__main__":
    # Small shapes consistent with the module: batch=2, in_channels=4, hidden=32.
    batch = 2
    in_channels = 4
    hidden_channels = 32
    num_layers = 2      # module-level `num_layers = 2` in the source file

    key = jax.random.PRNGKey(0)
    key, kx = jax.random.split(key)
    x = jax.random.normal(kx, (batch, in_channels), jnp.float32)

    params = init_params(key, in_channels, hidden_channels, num_layers)
    packed_params, layout = prepare_params(params)     # one-time prep, not per call

    y, (h_n, c_n) = encoder_forward(x, packed_params, layout,
                                    num_layers, hidden_channels)
    jax.block_until_ready((y, h_n, c_n))

    # Correctness check against the full (unsimplified) f32 LSTM reference.
    # Tolerance relaxed vs. a pure-f32 kernel because MXU operands are bf16
    # (f32 accumulation + f32 element-wise math keep the error ~1e-2 worst case).
    y_ref, (h_ref, c_ref) = encoder_reference(x, params, num_layers, hidden_channels)
    assert y.shape == (batch, hidden_channels)
    assert h_n.shape == (num_layers, batch, hidden_channels)
    assert c_n.shape == (num_layers, batch, hidden_channels)
    assert jnp.allclose(y, y_ref, atol=3e-2, rtol=3e-2)
    assert jnp.allclose(h_n, h_ref, atol=3e-2, rtol=3e-2)
    assert jnp.allclose(c_n, c_ref, atol=3e-2, rtol=3e-2)

    print("KERNEL_OK")
</pallas_src>

<mosaic_0001>
module attributes {stable_mosaic.version = 11 : i64} {
  func.func @_encoder_kernel(%arg0: memref<2x4xf32, #tpu.memory_space<vmem>>, %arg1: memref<56x128xbf16, #tpu.memory_space<vmem>>, %arg2: memref<2x32xf32, #tpu.memory_space<vmem>>, %arg3: memref<2x2x32xf32, #tpu.memory_space<vmem>>, %arg4: memref<2x2x32xf32, #tpu.memory_space<vmem>>) attributes {dimension_semantics = [], scalar_prefetch = 0 : i64, scratch_operands = 0 : i64, tpu.core_type = #tpu.core_type<tc>} {
    %c0 = arith.constant 0 : index
    %c0_0 = arith.constant 0 : index
    %0 = vector.load %arg0[%c0, %c0_0] : memref<2x4xf32, #tpu.memory_space<vmem>>, vector<2x4xf32>
    %1 = arith.truncf %0 : vector<2x4xf32> to vector<2x4xbf16>
    %c0_1 = arith.constant 0 : index
    %c0_2 = arith.constant 0 : index
    %2 = vector.load %arg1[%c0_1, %c0_2] : memref<56x128xbf16, #tpu.memory_space<vmem>>, vector<4x128xbf16>
    %cst = arith.constant dense<0.000000e+00> : vector<2x128xf32>
    %3 = tpu.matmul %1, %2, %cst {dimension_numbers = #tpu.dot_dimension_numbers<[1], [0], [0], [1], [0, 0, 1, 1], [], []>} : vector<2x4xbf16>, vector<4x128xbf16>, vector<2x128xf32> -> vector<2x128xf32>
    %c8 = arith.constant 8 : index
    %c0_3 = arith.constant 0 : index
    %4 = vector.load %arg1[%c8, %c0_3] : memref<56x128xbf16, #tpu.memory_space<vmem>>, vector<8x128xbf16>
    %5 = vector.extract_strided_slice %4 {offsets = [0, 0], sizes = [1, 128], strides = [1, 1]} : vector<8x128xbf16> to vector<1x128xbf16>
    %6 = arith.extf %5 : vector<1x128xbf16> to vector<1x128xf32>
    %7 = vector.broadcast %6 : vector<1x128xf32> to vector<2x128xf32>
    %8 = arith.addf %3, %7 : vector<2x128xf32>
    %9 = arith.negf %8 : vector<2x128xf32>
    %10 = math.exp %9 : vector<2x128xf32>
    %cst_4 = arith.constant 1.000000e+00 : f32
    %11 = vector.broadcast %cst_4 : f32 to vector<2x128xf32>
    %12 = arith.addf %11, %10 : vector<2x128xf32>
    %13 = arith.divf %11, %12 : vector<2x128xf32>
    %14 = math.tanh %8 : vector<2x128xf32>
    %15 = vector.extract_strided_slice %13 {offsets = [0, 0], sizes = [2, 32], strides = [1, 1]} : vector<2x128xf32> to vector<2x32xf32>
    %16 = vector.extract_strided_slice %14 {offsets = [0, 64], sizes = [2, 32], strides = [1, 1]} : vector<2x128xf32> to vector<2x32xf32>
    %17 = arith.mulf %15, %16 : vector<2x32xf32>
    %18 = vector.extract_strided_slice %13 {offsets = [0, 96], sizes = [2, 32], strides = [1, 1]} : vector<2x128xf32> to vector<2x32xf32>
    %19 = math.tanh %17 : vector<2x32xf32>
    %20 = arith.mulf %18, %19 : vector<2x32xf32>
    %c0_5 = arith.constant 0 : index
    %c0_6 = arith.constant 0 : index
    %c0_7 = arith.constant 0 : index
    %21 = vector.load %arg3[%c0_5, %c0_6, %c0_7] : memref<2x2x32xf32, #tpu.memory_space<vmem>>, vector<1x2x32xf32>
    %22 = vector.shape_cast %21 : vector<1x2x32xf32> to vector<2x32xf32>
    %23 = vector.shape_cast %20 : vector<2x32xf32> to vector<1x2x32xf32>
    tpu.vector_store %arg3[%c0_5, %c0_6, %c0_7], %23 {strides = array<i32>} : memref<2x2x32xf32, #tpu.memory_space<vmem>>, vector<1x2x32xf32>,
    %c0_8 = arith.constant 0 : index
    %c0_9 = arith.constant 0 : index
    %c0_10 = arith.constant 0 : index
    %24 = vector.load %arg4[%c0_8, %c0_9, %c0_10] : memref<2x2x32xf32, #tpu.memory_space<vmem>>, vector<1x2x32xf32>
    %25 = vector.shape_cast %24 : vector<1x2x32xf32> to vector<2x32xf32>
    %26 = vector.shape_cast %17 : vector<2x32xf32> to vector<1x2x32xf32>
    tpu.vector_store %arg4[%c0_8, %c0_9, %c0_10], %26 {strides = array<i32>} : memref<2x2x32xf32, #tpu.memory_space<vmem>>, vector<1x2x32xf32>,
    %27 = arith.truncf %20 : vector<2x32xf32> to vector<2x32xbf16>
    %c16 = arith.constant 16 : index
    %c0_11 = arith.constant 0 : index
    %28 = vector.load %arg1[%c16, %c0_11] : memref<56x128xbf16, #tpu.memory_space<vmem>>, vector<32x128xbf16>
    %cst_12 = arith.constant dense<0.000000e+00> : vector<2x128xf32>
    %29 = tpu.matmul %27, %28, %cst_12 {dimension_numbers = #tpu.dot_dimension_numbers<[1], [0], [0], [1], [0, 0, 1, 1], [], []>} : vector<2x32xbf16>, vector<32x128xbf16>, vector<2x128xf32> -> vector<2x128xf32>
    %c48 = arith.constant 48 : index
    %c0_13 = arith.constant 0 : index
    %30 = vector.load %arg1[%c48, %c0_13] : memref<56x128xbf16, #tpu.memory_space<vmem>>, vector<8x128xbf16>
    %31 = vector.extract_strided_slice %30 {offsets = [0, 0], sizes = [1, 128], strides = [1, 1]} : vector<8x128xbf16> to vector<1x128xbf16>
    %32 = arith.extf %31 : vector<1x128xbf16> to vector<1x128xf32>
    %33 = vector.broadcast %32 : vector<1x128xf32> to vector<2x128xf32>
    %34 = arith.addf %29, %33 : vector<2x128xf32>
    %35 = arith.negf %34 : vector<2x128xf32>
    %36 = math.exp %35 : vector<2x128xf32>
    %cst_14 = arith.constant 1.000000e+00 : f32
    %37 = vector.broadcast %cst_14 : f32 to vector<2x128xf32>
    %38 = arith.addf %37, %36 : vector<2x128xf32>
    %39 = arith.divf %37, %38 : vector<2x128xf32>
    %40 = math.tanh %34 : vector<2x128xf32>
    %41 = vector.extract_strided_slice %39 {offsets = [0, 0], sizes = [2, 32], strides = [1, 1]} : vector<2x128xf32> to vector<2x32xf32>
    %42 = vector.extract_strided_slice %40 {offsets = [0, 64], sizes = [2, 32], strides = [1, 1]} : vector<2x128xf32> to vector<2x32xf32>
    %43 = arith.mulf %41, %42 : vector<2x32xf32>
    %44 = vector.extract_strided_slice %39 {offsets = [0, 96], sizes = [2, 32], strides = [1, 1]} : vector<2x128xf32> to vector<2x32xf32>
    %45 = math.tanh %43 : vector<2x32xf32>
    %46 = arith.mulf %44, %45 : vector<2x32xf32>
    %c1 = arith.constant 1 : index
    %c0_15 = arith.constant 0 : index
    %c0_16 = arith.constant 0 : index
    %47 = vector.load %arg3[%c1, %c0_15, %c0_16] : memref<2x2x32xf32, #tpu.memory_space<vmem>>, vector<1x2x32xf32>
    %48 = vector.shape_cast %47 : vector<1x2x32xf32> to vector<2x32xf32>
    %49 = vector.shape_cast %46 : vector<2x32xf32> to vector<1x2x32xf32>
    tpu.vector_store %arg3[%c1, %c0_15, %c0_16], %49 {strides = array<i32>} : memref<2x2x32xf32, #tpu.memory_space<vmem>>, vector<1x2x32xf32>,
    %c1_17 = arith.constant 1 : index
    %c0_18 = arith.constant 0 : index
    %c0_19 = arith.constant 0 : index
    %50 = vector.load %arg4[%c1_17, %c0_18, %c0_19] : memref<2x2x32xf32, #tpu.memory_space<vmem>>, vector<1x2x32xf32>
    %51 = vector.shape_cast %50 : vector<1x2x32xf32> to vector<2x32xf32>
    %52 = vector.shape_cast %43 : vector<2x32xf32> to vector<1x2x32xf32>
    tpu.vector_store %arg4[%c1_17, %c0_18, %c0_19], %52 {strides = array<i32>} : memref<2x2x32xf32, #tpu.memory_space<vmem>>, vector<1x2x32xf32>,
    %c0_20 = arith.constant 0 : index
    %c0_21 = arith.constant 0 : index
    %53 = vector.load %arg2[%c0_20, %c0_21] : memref<2x32xf32, #tpu.memory_space<vmem>>, vector<2x32xf32>
    tpu.vector_store %arg2[%c0_20, %c0_21], %46 {strides = array<i32>} : memref<2x32xf32, #tpu.memory_space<vmem>>, vector<2x32xf32>,
    return
  }
}

</mosaic_0001>

<llo_original>
// kernel: encoder_forward.1
$region0: #{encoder_forward.1}
  #allocation0 [shape = 'u32[]', space=smem, size = 0x4, offset = 0x4, fixed_abs, tag = 'smem constant byte address 0x4 - core index']
  #allocation1 [shape = 'u32[144,128]{1,0:T(1,128)}', space=vmem, size = 0x12000, scoped, tag = 'internal scratch']
  %s0 = inlined_call_operand.hbm [shape: f32[2,4], index: 0, kind: input, shape index: {}]
  %s1 = inlined_call_operand.hbm [shape: bf16[56,128], index: 1, kind: input, shape index: {}]
  %s2 = inlined_call_operand.hbm [shape: f32[2,32], index: 2, kind: output, shape index: {0}]
  %s3 = inlined_call_operand.hbm [shape: f32[2,2,32], index: 3, kind: output, shape index: {1}]
  %s4 = inlined_call_operand.hbm [shape: f32[2,2,32], index: 4, kind: output, shape index: {2}]
  %5 = xla_tuple %s2, %s3, %s4
  %s6 = sld [smem:[#allocation0]]
  $region42: #{encoder_forward.1} parent=0
    _
  %s8 = ssub.s32 1, %s6
  %s9 = scalar_select 0, %s8, %s6
  $region1: #{encoder_forward.1} parent=0
    #allocation2 [shape = 'u8[1024]{0}', space=vmem, size = 0x400, scoped, tag = 'input window, operand 0, single buffered']
    #allocation3 [shape = 's32[1]{0}', space=sflag, size = 0x4, scoped, tag = 'scoped memory for encoder_forward.1']
    #allocation4 [shape = 's32[1]{0}', space=sflag, size = 0x4, scoped, tag = 'scoped memory for encoder_forward.1']
    #allocation5 [shape = 'u8[14336]{0}', space=vmem, size = 0x3800, scoped, tag = 'input window, operand 1, single buffered']
    #allocation6 [shape = 's32[1]{0}', space=sflag, size = 0x4, scoped, tag = 'scoped memory for encoder_forward.1']
    #allocation7 [shape = 'u8[1024]{0}', space=vmem, size = 0x400, scoped, tag = 'output window, operand 0, single buffered']
    #allocation8 [shape = 'u8[2048]{0}', space=vmem, size = 0x800, scoped, tag = 'output window, operand 1, single buffered']
    #allocation9 [shape = 's32[1]{0}', space=sflag, size = 0x4, scoped, tag = 'scoped memory for encoder_forward.1']
    #allocation10 [shape = 'u8[2048]{0}', space=vmem, size = 0x800, scoped, tag = 'output window, operand 2, single buffered']
    %10 = vsyncpa [#allocation3], 0
    %11 = vsyncpa [#allocation6], 0
    %12 = vsyncpa [#allocation4], 0
    %13 = vsyncpa [#allocation9], 0
    // Predicated region
    $region2: #{encoder_forward.1} parent=1 // pred_check
      _
    $region3: #{encoder_forward.1} parent=1 // pred_check_branch
      %15 = sbr.rel (0) target = $region5
    $region4: #{encoder_forward.1} parent=1 // pred_region
      %s17 = ssub.s32 32, 32
      %18 = vsyncadd [#allocation3], %s17
      %s20 = sshll.u32 [#allocation2], 4
      %s21 = int_to_ptr.vmem [resolvable:$true] %s20
      %23 = dma.hbm_to_vmem [thread:$0]  %s0, 32, %s21, [#allocation3]
    $region5: #{encoder_forward.1} parent=1 // pred_fallthru
      _
    // Predicated region
    $region6: #{encoder_forward.1} parent=1 // pred_check
      _
    $region7: #{encoder_forward.1} parent=1 // pred_check_branch
      %25 = sbr.rel (0) target = $region9
    $region8: #{encoder_forward.1} parent=1 // pred_region
      %s27 = ssub.s32 448, 448
      %28 = vsyncadd [#allocation6], %s27
      %s29 = sshll.u32 [#allocation5], 4
      %s30 = int_to_ptr.vmem [resolvable:$true] %s29
      %35 = dma.hbm_to_vmem [thread:$0]  %s1, 448, %s30, [#allocation6], 64, 64, 4
    $region9: #{encoder_forward.1} parent=1 // pred_fallthru
      _
    // Predicated region
    $region10: #{encoder_forward.1} parent=1 // pred_check
      _
    $region11: #{encoder_forward.1} parent=1 // pred_check_branch
      %37 = sbr.rel (0) target = $region13
    $region12: #{encoder_forward.1} parent=1 // pred_region
      %38 = dma.done [#allocation3], 32
    $region13: #{encoder_forward.1} parent=1 // pred_fallthru
      _
    // Predicated region
    $region14: #{encoder_forward.1} parent=1 // pred_check
      _
    $region15: #{encoder_forward.1} parent=1 // pred_check_branch
      %40 = sbr.rel (0) target = $region17
    $region16: #{encoder_forward.1} parent=1 // pred_region
      %41 = dma.done [#allocation6], 448
    $region17: #{encoder_forward.1} parent=1 // pred_fallthru
      _
    %v43 = vld [vmem:[#allocation2] sm:$0x3]
    %v44 = vpack.c.bf16 %v43, %v43
    %v45 = vld [vmem:[#allocation5] sm:$0x3]
    %v46 = vld [vmem:[#allocation5 + $0x4] sm:$0xf]
    %v47 = vunpack.c.l.bf16 %v46
    %v48 = vlaneseq
    %v49 = vshrl.u32 %v48, 7
    %v50 = vsub.s32 0, %v49
    %v51 = vrot.slane %v47, %v50
    %vm52 = vcmask 31744
    %v54 = vsel %vm52, %v44, 0
    %vm56 = vcmask 1041408
    %v58 = vsel %vm56, %v45, 0
    %60 = vmatprep.subr.bf16.mxu0 0
    %61 = vmatpush1.bf16.msra.mxu0 %v58
    %62 = vmatprep.subr.bf16.mxu0 0
    %63 = vmatpush1.bf16.msra.mxu0 0
    %64 = vmatprep.subr.bf16.mxu0 0
    %65 = vmatpush1.bf16.msra.mxu0 0
    %66 = vmatprep.subr.bf16.mxu0 0
    %67 = vmatpush1.bf16.msra.mxu0 0
    %68 = vmatprep.subr.bf16.mxu0 0
    %69 = vmatpush1.bf16.msra.mxu0 0
    %70 = vmatprep.subr.bf16.mxu0 0
    %71 = vmatpush1.bf16.msra.mxu0 0
    %72 = vmatprep.subr.bf16.mxu0 0
    %73 = vmatpush1.bf16.msra.mxu0 0
    %74 = vmatprep.subr.bf16.mxu0 0
    %75 = vmatpush1.bf16.msra.mxu0 0
    %76 = vmatprep.subr.bf16.mxu0 0
    %77 = vmatpush1.bf16.msra.mxu0 0
    %78 = vmatprep.subr.bf16.mxu0 0
    %79 = vmatpush1.bf16.msra.mxu0 0
    %80 = vmatprep.subr.bf16.mxu0 0
    %81 = vmatpush1.bf16.msra.mxu0 0
    %82 = vmatprep.subr.bf16.mxu0 0
    %83 = vmatpush1.bf16.msra.mxu0 0
    %84 = vmatprep.subr.bf16.mxu0 0
    %85 = vmatpush1.bf16.msra.mxu0 0
    %86 = vmatprep.subr.bf16.mxu0 0
    %87 = vmatpush1.bf16.msra.mxu0 0
    %88 = vmatprep.subr.bf16.mxu0 0
    %89 = vmatpush1.bf16.msra.mxu0 0
    %90 = vmatprep.subr.bf16.mxu0 0
    %91 = vmatpush1.bf16.msra.mxu0 0
    %92 = vmatprep.mubr.bf16.mxu0 0
    %93 = vmatmul.mubr.bf16.gmra.mrb[0].mxu0 %v54
    %v94 = vpop.f32.mrb[0].mxu0
    %v95 = vadd.f32 %v51, %v94
    %v96 = vpop.f32.mrb[0].mxu0
    %v97 = vpop.f32.mrb[0].mxu0
    %v98 = vpop.f32.mrb[0].mxu0
    %99 = vdwg.mxu0
    %v100 = vxor.u32 %v95, 2147483648
    %v101 = vmul.f32 %v100, 1.442695
    %v102 = vpow.pop %v101
    %v103 = vadd.f32 %v102, 1.0
    %v104 = vrcp.pop %v103
    %v105 = vmul.f32 1.0, %v104
    %v106 = vtanh.pop %v95
    %108 = vrot.lane.b32.xlu0 %v106, 64
    %v109 = vpop.permute.xlu0 %108
    %v111 = vmul.f32 %v105, %v109
    %v112 = vtanh.pop %v111
    %114 = vrot.lane.b32.xlu0 %v112, 96
    %v115 = vpop.permute.xlu0 %114
    %v117 = vmul.f32 %v105, %v115
    %119 = vrot.lane.b32.xlu0 %v117, 32
    %v120 = vpop.permute.xlu0 %119
    %vm122 = vcmask 254976
    %123 = vst.msk [vmem:[#allocation8] sm:$0x3] %vm122, %v120
    %124 = vst.msk [vmem:[#allocation10] sm:$0x3] %vm122, %v111
    %v125 = vpack.c.bf16 %v117, %v117
    %v126 = vld [vmem:[#allocation5 + $0x8] sm:$0xf]
    %v127 = vld [vmem:[#allocation5 + $0xc] sm:$0xf]
    %v128 = vld [vmem:[#allocation5 + $0x10] sm:$0xf]
    %v129 = vld [vmem:[#allocation5 + $0x14] sm:$0xf]
    %v130 = vld [vmem:[#allocation5 + $0x18] sm:$0xf]
    %v131 = vunpack.c.l.bf16 %v130
    %v132 = vlaneseq
    %v133 = vshrl.u32 %v132, 7
    %v134 = vsub.s32 0, %v133
    %v135 = vrot.slane %v131, %v134
    %137 = vrot.lane.b32.xlu0 %v125, 32
    %v138 = vpop.permute.xlu0 %137
    %v143 = vunpack.c.l.b16 %v126
    %v144 = vunpack.c.l.b16 %v127
    %v145 = vunpack.c.l.b16 %v128
    %v146 = vunpack.c.l.b16 %v129
    %v147 = vpack.c.b16 %v144, %v143
    %v148 = vpack.c.b16 %v146, %v145
    %vm151 = vcmask 261120
    %v153 = vsel %vm151, %v138, 0
    %155 = vmatprep.subr.bf16.mxu0 0
    %156 = vmatpush1.bf16.msra.mxu0 %v147
    %157 = vmatprep.subr.bf16.mxu0 0
    %158 = vmatpush1.bf16.msra.mxu0 %v148
    %159 = vmatprep.subr.bf16.mxu0 0
    %160 = vmatpush1.bf16.msra.mxu0 0
    %161 = vmatprep.subr.bf16.mxu0 0
    %162 = vmatpush1.bf16.msra.mxu0 0
    %163 = vmatprep.subr.bf16.mxu0 0
    %164 = vmatpush1.bf16.msra.mxu0 0
    %165 = vmatprep.subr.bf16.mxu0 0
    %166 = vmatpush1.bf16.msra.mxu0 0
    %167 = vmatprep.subr.bf16.mxu0 0
    %168 = vmatpush1.bf16.msra.mxu0 0
    %169 = vmatprep.subr.bf16.mxu0 0
    %170 = vmatpush1.bf16.msra.mxu0 0
    %171 = vmatprep.subr.bf16.mxu0 0
    %172 = vmatpush1.bf16.msra.mxu0 0
    %173 = vmatprep.subr.bf16.mxu0 0
    %174 = vmatpush1.bf16.msra.mxu0 0
    %175 = vmatprep.subr.bf16.mxu0 0
    %176 = vmatpush1.bf16.msra.mxu0 0
    %177 = vmatprep.subr.bf16.mxu0 0
    %178 = vmatpush1.bf16.msra.mxu0 0
    %179 = vmatprep.subr.bf16.mxu0 0
    %180 = vmatpush1.bf16.msra.mxu0 0
    %181 = vmatprep.subr.bf16.mxu0 0
    %182 = vmatpush1.bf16.msra.mxu0 0
    %183 = vmatprep.subr.bf16.mxu0 0
    %184 = vmatpush1.bf16.msra.mxu0 0
    %185 = vmatprep.subr.bf16.mxu0 0
    %186 = vmatpush1.bf16.msra.mxu0 0
    %187 = vmatprep.mubr.bf16.mxu0 0
    %188 = vmatmul.mubr.bf16.gmra.mrb[0].mxu0 %v153
    %v189 = vpop.f32.mrb[0].mxu0
    %v190 = vadd.f32 %v135, %v189
    %v191 = vpop.f32.mrb[0].mxu0
    %v192 = vpop.f32.mrb[0].mxu0
    %v193 = vpop.f32.mrb[0].mxu0
    %194 = vdwg.mxu0
    %v195 = vxor.u32 %v190, 2147483648
    %v196 = vmul.f32 %v195, 1.442695
    %v197 = vpow.pop %v196
    %v198 = vadd.f32 %v197, 1.0
    %v199 = vrcp.pop %v198
    %v200 = vmul.f32 1.0, %v199
    %v201 = vtanh.pop %v190
    %203 = vrot.lane.b32.xlu0 %v201, 64
    %v204 = vpop.permute.xlu0 %203
    %v206 = vmul.f32 %v200, %v204
    %v207 = vtanh.pop %v206
    %209 = vrot.lane.b32.xlu0 %v207, 96
    %v210 = vpop.permute.xlu0 %209
    %v212 = vmul.f32 %v200, %v210
    %214 = vrot.lane.b32.xlu0 %v212, 32
    %v215 = vpop.permute.xlu0 %214
    %s217 = scalar_lea.vmem [#allocation8], 2
    %218 = vst.msk [vmem:[%s217] sm:$0x3] %vm122, %v215
    %s219 = scalar_lea.vmem [#allocation10], 2
    %220 = vst.msk [vmem:[%s219] sm:$0x3] %vm122, %v206
    %221 = vst.msk [vmem:[#allocation7] sm:$0x3] %vm122, %v215
    // Predicated region
    $region18: #{encoder_forward.1} parent=1 // pred_check
      _
    $region19: #{encoder_forward.1} parent=1 // pred_check_branch
      %223 = sbr.rel (0) target = $region21
    $region20: #{encoder_forward.1} parent=1 // pred_region
      %s225 = ssub.s32 32, 32
      %226 = vsyncadd [#allocation4], %s225
      %s228 = sshll.u32 [#allocation7], 4
      %s229 = int_to_ptr.vmem [resolvable:$true] %s228
      %231 = dma.vmem_to_hbm [thread:$0]  %s229, 32, %s2, [#allocation4]
    $region21: #{encoder_forward.1} parent=1 // pred_fallthru
      _
    // Predicated region
    $region22: #{encoder_forward.1} parent=1 // pred_check
      _
    $region23: #{encoder_forward.1} parent=1 // pred_check_branch
      %233 = sbr.rel (0) target = $region25
    $region24: #{encoder_forward.1} parent=1 // pred_region
      %s235 = ssub.s32 64, 64
      %236 = vsyncadd [#allocation9], %s235
      %s237 = sshll.u32 [#allocation8], 4
      %s238 = int_to_ptr.vmem [resolvable:$true] %s237
      %243 = dma.vmem_to_hbm [thread:$0]  %s238, 64, %s3, [#allocation9], 32, 32, 2
    $region25: #{encoder_forward.1} parent=1 // pred_fallthru
      _
    // Predicated region
    $region26: #{encoder_forward.1} parent=1 // pred_check
      _
    $region27: #{encoder_forward.1} parent=1 // pred_check_branch
      %245 = sbr.rel (0) target = $region29
    $region28: #{encoder_forward.1} parent=1 // pred_region
      %s247 = ssub.s32 64, 64
      %248 = vsyncadd [#allocation9], %s247
      %s249 = sshll.u32 [#allocation10], 4
      %s250 = int_to_ptr.vmem [resolvable:$true] %s249
      %255 = dma.vmem_to_hbm [thread:$0]  %s250, 64, %s4, [#allocation9], 32, 32, 2
    $region29: #{encoder_forward.1} parent=1 // pred_fallthru
      _
    // Predicated region
    $region30: #{encoder_forward.1} parent=1 // pred_check
      _
    $region31: #{encoder_forward.1} parent=1 // pred_check_branch
      %257 = sbr.rel (0) target = $region33
    $region32: #{encoder_forward.1} parent=1 // pred_region
      %258 = dma.done [#allocation4], 32
    $region33: #{encoder_forward.1} parent=1 // pred_fallthru
      _
    // Predicated region
    $region34: #{encoder_forward.1} parent=1 // pred_check
      _
    $region35: #{encoder_forward.1} parent=1 // pred_check_branch
      %260 = sbr.rel (0) target = $region37
    $region36: #{encoder_forward.1} parent=1 // pred_region
      %261 = dma.done [#allocation9], 64
    $region37: #{encoder_forward.1} parent=1 // pred_fallthru
      _
    // Predicated region
    $region38: #{encoder_forward.1} parent=1 // pred_check
      _
    $region39: #{encoder_forward.1} parent=1 // pred_check_branch
      %263 = sbr.rel (0) target = $region41
    $region40: #{encoder_forward.1} parent=1 // pred_region
      %264 = dma.done [#allocation9], 64
    $region41: #{encoder_forward.1} parent=1 // pred_fallthru
      _
    %265 = vsyncpa [#allocation3], 1
    %266 = vsyncpa [#allocation6], 1
    %267 = vsyncpa [#allocation4], 1
    %268 = vsyncpa [#allocation9], 1

</llo_original>
